<compile_context>
chip_gen: v5e
topology: v5e:2x2
jax: 0.10.0
libtpu: 0.0.40
codegen_flags: <defaults>
</compile_context>

<pallas_src>
import functools

import jax
import jax.numpy as jnp
from jax.experimental import pallas as pl
from jax.experimental.pallas import tpu as pltpu


_LANE = 128


def _round_up(x, m):
    return ((x + m - 1) // m) * m


def _vmem_budget():
    """Generation-aware VMEM budget: capacity minus ~16 MiB headroom.
    v5e/v6e (128 MiB) -> ~112 MiB; v7x (64 MiB/TC) -> ~48 MiB."""
    cap = None
    try:
        cap = getattr(pltpu.get_tpu_info(), "vmem_capacity_bytes", None)
    except Exception:
        cap = None
    if not cap:
        cap = 64 * 1024 * 1024              # conservative default (v7x-sized)
    return int(max(cap - 16 * 1024 * 1024, 32 * 1024 * 1024))


# ----------------------------------------------------------------------------
# Resident path: full 0/1 adjacency in VMEM, k hops per lane-dense feature tile.
# ----------------------------------------------------------------------------
def _sgc_resident_kernel(a_ref, norm_ref, x_ref, o_ref, *, k):
    a = a_ref[...]                          # (n_pad, n_pad) exact 0/1 (bf16 or f32)
    norm = norm_ref[...]                    # (n_pad, 1) f32
    x = x_ref[...].astype(jnp.float32)      # (n_pad, tile_d) f32 between hops
    for _ in range(k):                      # small static k -> unrolled matmul chain
        z = (x * norm).astype(a.dtype)      # VPU scale in f32, cast only at the MXU input
        y = jnp.dot(a, z, preferred_element_type=jnp.float32)    # MXU
        x = y * norm
    o_ref[...] = x.astype(o_ref.dtype)


def _choose_resident_tile_d(n_pad, d_pad, a_bytes, x_itemsize, budget, max_tile=512):
    """Largest feature-panel width (multiple of 128, <= max_tile, divides d_pad) whose
    resident-path footprint fits the budget; prefer >=2 (ideally even) grid steps so
    both v7x TensorCores get work.  Returns None if nothing fits (-> streamed path)."""
    best, best_key = None, None
    for t in range(_LANE, min(max_tile, d_pad) + 1, _LANE):
        if d_pad % t:
            continue
        need = (a_bytes                        # operator, single-buffered
                + n_pad * 4                    # norm
                + 2 * n_pad * t * x_itemsize   # input panel (double-buffered)
                + 2 * n_pad * t * x_itemsize   # output panel (double-buffered)
                + 3 * n_pad * t * 4)           # f32 working copies inside the body
        if need > budget:
            continue
        steps = d_pad // t
        key = (steps >= 2 and steps % 2 == 0, steps >= 2, t)
        if best_key is None or key > best_key:
            best, best_key = t, key
    return best


def _sgc_resident(a_pad, norm_pad, x_pad, *, k, tile_d, budget):
    n_pad = a_pad.shape[0]
    d_pad = x_pad.shape[1]
    a_bytes = n_pad * n_pad * a_pad.dtype.itemsize
    kernel = functools.partial(_sgc_resident_kernel, k=k)
    return pl.pallas_call(
        kernel,
        out_shape=jax.ShapeDtypeStruct((n_pad, d_pad), x_pad.dtype),
        grid_spec=pltpu.PrefetchScalarGridSpec(
            num_scalar_prefetch=0,
            grid=(d_pad // tile_d,),
            in_specs=[
                # Operator block never changes across the grid -> single resident copy.
                pl.BlockSpec((n_pad, n_pad), lambda j: (0, 0),
                             pipeline_mode=pl.Buffered(1)),
                pl.BlockSpec((n_pad, 1), lambda j: (0, 0)),
                pl.BlockSpec((n_pad, tile_d), lambda j: (0, j)),
            ],
            out_specs=pl.BlockSpec((n_pad, tile_d), lambda j: (0, j)),
        ),
        compiler_params=pltpu.CompilerParams(
            dimension_semantics=("parallel",),
            vmem_limit_bytes=budget,
        ),
        cost_estimate=pl.CostEstimate(
            flops=2 * k * n_pad * n_pad * d_pad,
            transcendentals=0,
            bytes_accessed=a_bytes + (2 * n_pad * d_pad + n_pad) * 4,
        ),
    )(a_pad, norm_pad, x_pad)


# ----------------------------------------------------------------------------
# Streamed path: all k hops fused in one pallas_call; A row-blocks streamed from
# HBM while the feature panel (pre-scaled by norm) stays resident in VMEM scratch.
# Recurrence on the pre-scaled panel z_h = norm * x_h:
#   z_{h+1} = norm^2 * (A @ z_h),   output x_k = norm * (A @ z_{k-1}).
# ----------------------------------------------------------------------------
def _sgc_streamed_kernel(a_ref, norm_ref, x_ref, o_ref, z_ref, *, k, tm, n_pad):
    h = pl.program_id(1)                    # hop index
    i = pl.program_id(2)                    # dst row-block index
    cur = h % 2                             # ping-pong half of z_ref

    @pl.when(jnp.logical_and(h == 0, i == 0))
    def _init():                            # z_0 = norm * x_0 (full panel, once per j)
        z_ref[pl.ds(0, n_pad), :] = (
            x_ref[...].astype(jnp.float32) * norm_ref[...]).astype(z_ref.dtype)

    src0 = pl.multiple_of(cur * n_pad, n_pad)
    z_cur = z_ref[pl.ds(src0, n_pad), :]                          # (n_pad, tile_d)
    acc = jnp.dot(a_ref[...], z_cur, preferred_element_type=jnp.float32)   # (tm, tile_d)

    row0 = pl.multiple_of(i * tm, tm)
    norm_i = norm_ref[pl.ds(row0, tm), :]                         # (tm, 1) f32

    @pl.when(h + 1 < k)
    def _next_hop():                        # z_{h+1}[rows i] = norm_i^2 * acc
        dst0 = pl.multiple_of((1 - cur) * n_pad + row0, tm)
        z_ref[pl.ds(dst0, tm), :] = (acc * (norm_i * norm_i)).astype(z_ref.dtype)

    @pl.when(h + 1 == k)
    def _final_hop():                       # x_k[rows i] = norm_i * acc
        o_ref[pl.ds(row0, tm), :] = (acc * norm_i).astype(o_ref.dtype)


def _choose_streamed_tiles(n_pad, d_pad, a_itemsize, x_itemsize, budget):
    """Pick (tm, tile_d).  tile_d is maximized first (A is re-read k*(D/tile_d) times,
    so wide panels are the dominant HBM-traffic lever); >=2 feature-panel steps are a
    tie-breaker for v7x's 2 TensorCores; tm stays a moderate row-block of A."""
    d_cands = [t for t in range(_LANE, min(d_pad, 1024) + 1, _LANE) if d_pad % t == 0]
    m_cands = [m for m in (512, 384, 256, 128) if m <= n_pad and n_pad % m == 0]
    if not m_cands:
        m_cands = [_LANE]
    best, best_key = None, None
    for t in d_cands:
        for tm in m_cands:
            need = (2 * tm * n_pad * a_itemsize      # A row block (double-buffered)
                    + 2 * n_pad * t * x_itemsize     # input feature panel
                    + 2 * n_pad * t * x_itemsize     # output panel
                    + 2 * n_pad * t * a_itemsize     # ping-pong z scratch
                    + n_pad * 4                      # norm
                    + 2 * tm * t * 4)                # accumulator temporaries
            if need > budget:
                continue
            key = (t, d_pad // t >= 2, tm)
            if best_key is None or key > best_key:
                best, best_key = (tm, t), key
    if best is None:
        # TODO(synk): graphs so large that even a (n_pad, 128) feature panel does not
        #             fit VMEM would need a fully 2-D-tiled streaming variant.
        best = (m_cands[-1], _LANE)
    return best


def _sgc_streamed(a_pad, norm_pad, x_pad, *, k, tm, tile_d, budget):
    n_pad = a_pad.shape[0]
    d_pad = x_pad.shape[1]
    a_bytes = n_pad * n_pad * a_pad.dtype.itemsize
    kernel = functools.partial(_sgc_streamed_kernel, k=k, tm=tm, n_pad=n_pad)
    return pl.pallas_call(
        kernel,
        out_shape=jax.ShapeDtypeStruct((n_pad, d_pad), x_pad.dtype),
        grid_spec=pltpu.PrefetchScalarGridSpec(
            num_scalar_prefetch=0,
            grid=(d_pad // tile_d, k, n_pad // tm),
            in_specs=[
                pl.BlockSpec((tm, n_pad), lambda j, h, i: (i, 0)),      # A rows (streamed)
                pl.BlockSpec((n_pad, 1), lambda j, h, i: (0, 0)),       # norm (resident)
                pl.BlockSpec((n_pad, tile_d), lambda j, h, i: (0, j)),  # feature panel
            ],
            out_specs=pl.BlockSpec((n_pad, tile_d), lambda j, h, i: (0, j)),
            scratch_shapes=[pltpu.VMEM((2 * n_pad, tile_d), a_pad.dtype)],
        ),
        compiler_params=pltpu.CompilerParams(
            dimension_semantics=("parallel", "arbitrary", "arbitrary"),
            vmem_limit_bytes=budget,
        ),
        cost_estimate=pl.CostEstimate(
            flops=2 * k * n_pad * n_pad * d_pad,
            transcendentals=0,
            bytes_accessed=k * (d_pad // tile_d) * a_bytes + (2 * n_pad * d_pad + n_pad) * 4,
        ),
    )(a_pad, norm_pad, x_pad)


# ----------------------------------------------------------------------------
# Public wrapper: mirrors CustomSGC_Agg.forward (norm=None, cached=False).
# ----------------------------------------------------------------------------
def sgc_agg(adj, feat, *, k=1, adj_dtype=jnp.bfloat16, force_streamed=False):
    """adj: (N, N) dense adjacency, A[dst, src] in {0, 1}.  feat: (N, D) node features.
    Returns (N, D) = (D^-1/2 A D^-1/2)^k @ feat.  The adjacency is kept as exact 0/1 in
    `adj_dtype` (bf16 default: exact for 0/1, full-rate MXU); use adj_dtype=float32 for
    weighted dense encodings."""
    N, D = feat.shape
    assert adj.shape == (N, N)
    if k == 0:
        return feat

    # in_degrees().clamp(min=1) ** -0.5  (nonzero count per dst row).
    degs = jnp.sum(adj != 0, axis=1, dtype=jnp.float32)
    norm = jax.lax.rsqrt(jnp.maximum(degs, 1.0))

    n_pad = _round_up(N, _LANE)
    d_pad = _round_up(D, _LANE)
    # Single cast+pad pass per operand; padded rows/cols of A and rows of x are zero so
    # real-node outputs are unchanged, padded norm is 1 (irrelevant, multiplied by zeros).
    a_pad = jnp.pad(adj.astype(adj_dtype), ((0, n_pad - N), (0, n_pad - N)))
    x_pad = jnp.pad(feat, ((0, n_pad - N), (0, d_pad - D)))
    norm_pad = jnp.pad(norm, (0, n_pad - N), constant_values=1.0).reshape(n_pad, 1)
    # TODO(synk): mirror the module's `cached=True` mode by memoizing a_pad/norm_pad
    #             (or the k-hop result) across calls when the graph is static.

    budget = _vmem_budget()
    a_bytes = n_pad * n_pad * jnp.dtype(adj_dtype).itemsize
    x_itemsize = jnp.dtype(feat.dtype).itemsize

    tile_d = None
    if not force_streamed:
        tile_d = _choose_resident_tile_d(n_pad, d_pad, a_bytes, x_itemsize, budget)

    if tile_d is not None:
        out_pad = _sgc_resident(a_pad, norm_pad, x_pad, k=k, tile_d=tile_d, budget=budget)
    else:
        tm, t = _choose_streamed_tiles(n_pad, d_pad, jnp.dtype(adj_dtype).itemsize,
                                       x_itemsize, budget)
        out_pad = _sgc_streamed(a_pad, norm_pad, x_pad, k=k, tm=tm, tile_d=t, budget=budget)

    return out_pad[:N, :D].astype(feat.dtype)


def sgc_agg_reference(adj, feat, *, k=1):
    """Pure-JAX reference mirroring the PyTorch/DGL forward."""
    degs = jnp.sum((adj != 0).astype(jnp.float32), axis=1, keepdims=True)
    norm = jnp.power(jnp.maximum(degs, 1.0), -0.5)
    x = feat
    for _ in range(k):
        x = x * norm
        x = adj @ x
        x = x * norm
    return x


if __name__ == "__main__":
    key = jax.random.PRNGKey(0)
    k_feat, k_adj = jax.random.split(key)

    N, D, K_HOPS = 8, 32, 2     # small graph: 8 nodes, 32-dim features, 2 hops

    feat = jax.random.normal(k_feat, (N, D), dtype=jnp.float32)
    # Random directed adjacency + self-loops (every node has in-degree >= 1, matching
    # the module's allow_zero_in_degree=False requirement).
    adj = (jax.random.uniform(k_adj, (N, N)) < 0.3).astype(jnp.float32)
    adj = jnp.maximum(adj, jnp.eye(N, dtype=jnp.float32))

    ref = sgc_agg_reference(adj, feat, k=K_HOPS)

    # 1) Resident path, exact f32 operator.
    out_f32 = jax.block_until_ready(sgc_agg(adj, feat, k=K_HOPS, adj_dtype=jnp.float32))
    assert out_f32.shape == (N, D)
    assert jnp.allclose(out_f32, ref, atol=1e-5, rtol=1e-5), "resident f32 mismatch"

    # 2) Resident path, default bf16 adjacency (0/1 exact; only the feature panel is
    #    rounded to bf16 at the MXU input, norm stays f32 on the VPU).
    out_bf16 = jax.block_until_ready(sgc_agg(adj, feat, k=K_HOPS))
    assert jnp.allclose(out_bf16, ref, atol=5e-2, rtol=5e-2), "resident bf16 mismatch"

    # 3) Fused k-hop streamed fallback (A row-blocks streamed, feature panel resident).
    out_st = jax.block_until_ready(
        sgc_agg(adj, feat, k=K_HOPS, adj_dtype=jnp.float32, force_streamed=True))
    assert jnp.allclose(out_st, ref, atol=1e-5, rtol=1e-5), "streamed f32 mismatch"

    out_st_bf16 = jax.block_until_ready(sgc_agg(adj, feat, k=K_HOPS, force_streamed=True))
    assert jnp.allclose(out_st_bf16, ref, atol=5e-2, rtol=5e-2), "streamed bf16 mismatch"

    print("KERNEL_OK")
</pallas_src>

<mosaic_0001>
module attributes {stable_mosaic.version = 11 : i64} {
  func.func @_sgc_resident_kernel(%arg0: i32, %arg1: memref<128x128xf32, #tpu.memory_space<vmem>>, %arg2: memref<128x1xf32, #tpu.memory_space<vmem>>, %arg3: memref<128x128xf32, #tpu.memory_space<vmem>>, %arg4: memref<128x128xf32, #tpu.memory_space<vmem>>) attributes {dimension_semantics = [#tpu.dimension_semantics<parallel>], iteration_bounds = array<i64: 1>, scalar_prefetch = 0 : i64, scratch_operands = 0 : i64, tpu.core_type = #tpu.core_type<tc>, window_params = [{pipeline_mode = #tpu.pipeline_mode<synchronous>, transform_indices = @transform_0, window_bounds = array<i64: 128, 128>}, {pipeline_mode = #tpu.pipeline_mode<synchronous>, transform_indices = @transform_1, window_bounds = array<i64: 128, 1>}, {transform_indices = @transform_2, window_bounds = array<i64: 128, 128>}, {transform_indices = @transform_3, window_bounds = array<i64: 128, 128>}]} {
    %c0 = arith.constant 0 : index
    %c0_0 = arith.constant 0 : index
    %0 = vector.load %arg1[%c0, %c0_0] : memref<128x128xf32, #tpu.memory_space<vmem>>, vector<128x128xf32>
    %c0_1 = arith.constant 0 : index
    %c0_2 = arith.constant 0 : index
    %1 = vector.load %arg2[%c0_1, %c0_2] : memref<128x1xf32, #tpu.memory_space<vmem>>, vector<128x1xf32>
    %c0_3 = arith.constant 0 : index
    %c0_4 = arith.constant 0 : index
    %2 = vector.load %arg3[%c0_3, %c0_4] : memref<128x128xf32, #tpu.memory_space<vmem>>, vector<128x128xf32>
    %3 = vector.broadcast %1 : vector<128x1xf32> to vector<128x128xf32>
    %4 = arith.mulf %2, %3 : vector<128x128xf32>
    %cst = arith.constant dense<0.000000e+00> : vector<128x128xf32>
    %5 = tpu.matmul %0, %4, %cst {dimension_numbers = #tpu.dot_dimension_numbers<[1], [0], [0], [1], [0, 0, 1, 1], [], []>} : vector<128x128xf32>, vector<128x128xf32>, vector<128x128xf32> -> vector<128x128xf32>
    %6 = vector.broadcast %1 : vector<128x1xf32> to vector<128x128xf32>
    %7 = arith.mulf %5, %6 : vector<128x128xf32>
    %8 = vector.broadcast %1 : vector<128x1xf32> to vector<128x128xf32>
    %9 = arith.mulf %7, %8 : vector<128x128xf32>
    %cst_5 = arith.constant dense<0.000000e+00> : vector<128x128xf32>
    %10 = tpu.matmul %0, %9, %cst_5 {dimension_numbers = #tpu.dot_dimension_numbers<[1], [0], [0], [1], [0, 0, 1, 1], [], []>} : vector<128x128xf32>, vector<128x128xf32>, vector<128x128xf32> -> vector<128x128xf32>
    %11 = vector.broadcast %1 : vector<128x1xf32> to vector<128x128xf32>
    %12 = arith.mulf %10, %11 : vector<128x128xf32>
    %c0_6 = arith.constant 0 : index
    %c0_7 = arith.constant 0 : index
    %13 = vector.load %arg4[%c0_6, %c0_7] : memref<128x128xf32, #tpu.memory_space<vmem>>, vector<128x128xf32>
    tpu.vector_store %arg4[%c0_6, %c0_7], %12 {strides = array<i32>} : memref<128x128xf32, #tpu.memory_space<vmem>>, vector<128x128xf32>,
    return
  }
  func.func @transform_0(%arg0: i32) -> (i32, i32) {
    %c0_i32 = arith.constant 0 : i32
    %c0_i32_0 = arith.constant 0 : i32
    %c0_i32_1 = arith.constant 0 : i32
    return %c0_i32, %c0_i32_0 : i32, i32
  }
  func.func @transform_1(%arg0: i32) -> (i32, i32) {
    %c0_i32 = arith.constant 0 : i32
    %c0_i32_0 = arith.constant 0 : i32
    %c0_i32_1 = arith.constant 0 : i32
    return %c0_i32, %c0_i32_0 : i32, i32
  }
  func.func @transform_2(%arg0: i32) -> (i32, i32) {
    %c0_i32 = arith.constant 0 : i32
    %c0_i32_0 = arith.constant 0 : i32
    return %c0_i32, %arg0 : i32, i32
  }
  func.func @transform_3(%arg0: i32) -> (i32, i32) {
    %c0_i32 = arith.constant 0 : i32
    %c0_i32_0 = arith.constant 0 : i32
    return %c0_i32, %arg0 : i32, i32
  }
}

</mosaic_0001>

<llo_original>
// kernel: tpu_custom_call.1
$region0: #{tpu_custom_call.1}
  #allocation0 [shape = 'u32[]', space=smem, size = 0x4, offset = 0x4, fixed_abs, tag = 'smem constant byte address 0x4 - core index']
  #allocation1 [shape = 'u32[72,128]{1,0:T(1,128)}', space=vmem, size = 0x9000, scoped, tag = 'internal scratch']
  %s0 = inlined_call_operand.vmem [shape: f32[128,128], index: 0, kind: input, shape index: {}]
  %s1 = inlined_call_operand.vmem [shape: f32[128,1], index: 1, kind: input, shape index: {}]
  %s2 = inlined_call_operand.hbm [shape: f32[128,128], index: 2, kind: input, shape index: {}]
  %s3 = inlined_call_operand.hbm [shape: f32[128,128], index: 3, kind: output, shape index: {}]
  %s4 = sld [smem:[#allocation0]]
  $region26: #{tpu_custom_call.1} parent=0
    _
  %s6 = ssub.s32 1, %s4
  %s7 = scalar_select 0, %s6, %s4
  $region1: #{tpu_custom_call.1} parent=0
    #allocation2 [shape = 'u8[65536]{0}', space=vmem, size = 0x10000, scoped, tag = 'input window, operand 2, single buffered']
    #allocation3 [shape = 's32[1]{0}', space=sflag, size = 0x4, scoped, tag = 'scoped memory for tpu_custom_call.1']
    #allocation4 [shape = 's32[1]{0}', space=sflag, size = 0x4, scoped, tag = 'scoped memory for tpu_custom_call.1']
    #allocation5 [shape = 'u8[65536]{0}', space=vmem, size = 0x10000, scoped, tag = 'output window, operand 0, single buffered']
    %8 = vsyncpa [#allocation3], 0
    %9 = vsyncpa [#allocation4], 0
    // Predicated region
    $region2: #{tpu_custom_call.1} parent=1 // pred_check
      _
    $region3: #{tpu_custom_call.1} parent=1 // pred_check_branch
      %11 = sbr.rel (0) target = $region5
    $region4: #{tpu_custom_call.1} parent=1 // pred_region
      _
    $region5: #{tpu_custom_call.1} parent=1 // pred_fallthru
      _
    // Predicated region
    $region6: #{tpu_custom_call.1} parent=1 // pred_check
      _
    $region7: #{tpu_custom_call.1} parent=1 // pred_check_branch
      %13 = sbr.rel (0) target = $region9
    $region8: #{tpu_custom_call.1} parent=1 // pred_region
      _
    $region9: #{tpu_custom_call.1} parent=1 // pred_fallthru
      _
    // Predicated region
    $region10: #{tpu_custom_call.1} parent=1 // pred_check
      _
    $region11: #{tpu_custom_call.1} parent=1 // pred_check_branch
      %15 = sbr.rel (0) target = $region13
    $region12: #{tpu_custom_call.1} parent=1 // pred_region
      %17 = vsyncadd [#allocation3], 0
      %s18 = sshll.u32 %s2, 4
      %s19 = int_to_ptr.hbm [resolvable:$true] %s18
      %s20 = sshll.u32 [#allocation2], 4
      %s21 = int_to_ptr.vmem [resolvable:$true] %s20
      %26 = dma.hbm_to_vmem [thread:$0]  %s19, 2048, %s21, [#allocation3], 128, 128, 8
    $region13: #{tpu_custom_call.1} parent=1 // pred_fallthru
      _
    // Predicated region
    $region14: #{tpu_custom_call.1} parent=1 // pred_check
      _
    $region15: #{tpu_custom_call.1} parent=1 // pred_check_branch
      %28 = sbr.rel (0) target = $region17
    $region16: #{tpu_custom_call.1} parent=1 // pred_region
      %30 = dma.done [#allocation3], 2048
    $region17: #{tpu_custom_call.1} parent=1 // pred_fallthru
      _
    %v31 = vld [vmem:[%s0] sm:$0xff]
    %v32 = vld [vmem:[%s0 + $0x8] sm:$0xff]
    %v33 = vld [vmem:[%s0 + $0x10] sm:$0xff]
    %v34 = vld [vmem:[%s0 + $0x18] sm:$0xff]
    %v35 = vld [vmem:[%s0 + $0x20] sm:$0xff]
    %v36 = vld [vmem:[%s0 + $0x28] sm:$0xff]
    %v37 = vld [vmem:[%s0 + $0x30] sm:$0xff]
    %v38 = vld [vmem:[%s0 + $0x38] sm:$0xff]
    %v39 = vld [vmem:[%s0 + $0x40] sm:$0xff]
    %v40 = vld [vmem:[%s0 + $0x48] sm:$0xff]
    %v41 = vld [vmem:[%s0 + $0x50] sm:$0xff]
    %v42 = vld [vmem:[%s0 + $0x58] sm:$0xff]
    %v43 = vld [vmem:[%s0 + $0x60] sm:$0xff]
    %v44 = vld [vmem:[%s0 + $0x68] sm:$0xff]
    %v45 = vld [vmem:[%s0 + $0x70] sm:$0xff]
    %v46 = vld [vmem:[%s0 + $0x78] sm:$0xff]
    %v47 = vld [vmem:[%s1] sm:$0xff]
    %v48 = vld [vmem:[%s1 + $0x8] sm:$0xff]
    %v49 = vld [vmem:[%s1 + $0x10] sm:$0xff]
    %v50 = vld [vmem:[%s1 + $0x18] sm:$0xff]
    %v51 = vld [vmem:[%s1 + $0x20] sm:$0xff]
    %v52 = vld [vmem:[%s1 + $0x28] sm:$0xff]
    %v53 = vld [vmem:[%s1 + $0x30] sm:$0xff]
    %v54 = vld [vmem:[%s1 + $0x38] sm:$0xff]
    %v55 = vld [vmem:[%s1 + $0x40] sm:$0xff]
    %v56 = vld [vmem:[%s1 + $0x48] sm:$0xff]
    %v57 = vld [vmem:[%s1 + $0x50] sm:$0xff]
    %v58 = vld [vmem:[%s1 + $0x58] sm:$0xff]
    %v59 = vld [vmem:[%s1 + $0x60] sm:$0xff]
    %v60 = vld [vmem:[%s1 + $0x68] sm:$0xff]
    %v61 = vld [vmem:[%s1 + $0x70] sm:$0xff]
    %v62 = vld [vmem:[%s1 + $0x78] sm:$0xff]
    %v63 = vld [vmem:[#allocation2] sm:$0xff]
    %v64 = vld [vmem:[#allocation2 + $0x8] sm:$0xff]
    %v65 = vld [vmem:[#allocation2 + $0x10] sm:$0xff]
    %v66 = vld [vmem:[#allocation2 + $0x18] sm:$0xff]
    %v67 = vld [vmem:[#allocation2 + $0x20] sm:$0xff]
    %v68 = vld [vmem:[#allocation2 + $0x28] sm:$0xff]
    %v69 = vld [vmem:[#allocation2 + $0x30] sm:$0xff]
    %v70 = vld [vmem:[#allocation2 + $0x38] sm:$0xff]
    %v71 = vld [vmem:[#allocation2 + $0x40] sm:$0xff]
    %v72 = vld [vmem:[#allocation2 + $0x48] sm:$0xff]
    %v73 = vld [vmem:[#allocation2 + $0x50] sm:$0xff]
    %v74 = vld [vmem:[#allocation2 + $0x58] sm:$0xff]
    %v75 = vld [vmem:[#allocation2 + $0x60] sm:$0xff]
    %v76 = vld [vmem:[#allocation2 + $0x68] sm:$0xff]
    %v77 = vld [vmem:[#allocation2 + $0x70] sm:$0xff]
    %v78 = vld [vmem:[#allocation2 + $0x78] sm:$0xff]
    %80 = vset.pattern.permute.xlu0 0
    %81 = vperm.xlu0 %80, %v47
    %v82 = vpop.permute.xlu0 %81
    %85 = vset.pattern.permute.xlu0 0
    %86 = vperm.xlu0 %85, %v48
    %v87 = vpop.permute.xlu0 %86
    %90 = vset.pattern.permute.xlu0 0
    %91 = vperm.xlu0 %90, %v49
    %v92 = vpop.permute.xlu0 %91
    %95 = vset.pattern.permute.xlu0 0
    %96 = vperm.xlu0 %95, %v50
    %v97 = vpop.permute.xlu0 %96
    %100 = vset.pattern.permute.xlu0 0
    %101 = vperm.xlu0 %100, %v51
    %v102 = vpop.permute.xlu0 %101
    %105 = vset.pattern.permute.xlu0 0
    %106 = vperm.xlu0 %105, %v52
    %v107 = vpop.permute.xlu0 %106
    %110 = vset.pattern.permute.xlu0 0
    %111 = vperm.xlu0 %110, %v53
    %v112 = vpop.permute.xlu0 %111
    %115 = vset.pattern.permute.xlu0 0
    %116 = vperm.xlu0 %115, %v54
    %v117 = vpop.permute.xlu0 %116
    %120 = vset.pattern.permute.xlu0 0
    %121 = vperm.xlu0 %120, %v55
    %v122 = vpop.permute.xlu0 %121
    %125 = vset.pattern.permute.xlu0 0
    %126 = vperm.xlu0 %125, %v56
    %v127 = vpop.permute.xlu0 %126
    %130 = vset.pattern.permute.xlu0 0
    %131 = vperm.xlu0 %130, %v57
    %v132 = vpop.permute.xlu0 %131
    %135 = vset.pattern.permute.xlu0 0
    %136 = vperm.xlu0 %135, %v58
    %v137 = vpop.permute.xlu0 %136
    %140 = vset.pattern.permute.xlu0 0
    %141 = vperm.xlu0 %140, %v59
    %v142 = vpop.permute.xlu0 %141
    %145 = vset.pattern.permute.xlu0 0
    %146 = vperm.xlu0 %145, %v60
    %v147 = vpop.permute.xlu0 %146
    %150 = vset.pattern.permute.xlu0 0
    %151 = vperm.xlu0 %150, %v61
    %v152 = vpop.permute.xlu0 %151
    %155 = vset.pattern.permute.xlu0 0
    %156 = vperm.xlu0 %155, %v62
    %v157 = vpop.permute.xlu0 %156
    %v159 = vmul.f32 %v63, %v82
    %v160 = vmul.f32 %v64, %v87
    %v161 = vmul.f32 %v65, %v92
    %v162 = vmul.f32 %v66, %v97
    %v163 = vmul.f32 %v67, %v102
    %v164 = vmul.f32 %v68, %v107
    %v165 = vmul.f32 %v69, %v112
    %v166 = vmul.f32 %v70, %v117
    %v167 = vmul.f32 %v71, %v122
    %v168 = vmul.f32 %v72, %v127
    %v169 = vmul.f32 %v73, %v132
    %v170 = vmul.f32 %v74, %v137
    %v171 = vmul.f32 %v75, %v142
    %v172 = vmul.f32 %v76, %v147
    %v173 = vmul.f32 %v77, %v152
    %v174 = vmul.f32 %v78, %v157
    %175 = vmatpush.msra.mxu0 %v174
    %176 = vmatpush.msra.mxu0 %v173
    %177 = vmatpush.msra.mxu0 %v172
    %178 = vmatpush.msra.mxu0 %v171
    %179 = vmatpush.msra.mxu0 %v170
    %180 = vmatpush.msra.mxu0 %v169
    %181 = vmatpush.msra.mxu0 %v168
    %182 = vmatpush.msra.mxu0 %v167
    %183 = vmatpush.msra.mxu0 %v166
    %184 = vmatpush.msra.mxu0 %v165
    %185 = vmatpush.msra.mxu0 %v164
    %186 = vmatpush.msra.mxu0 %v163
    %187 = vmatpush.msra.mxu0 %v162
    %188 = vmatpush.msra.mxu0 %v161
    %189 = vmatpush.msra.mxu0 %v160
    %190 = vmatpush.msra.mxu0 %v159
    %191 = vmatmul.f32.gmra.mxu0 %v31
    %v192 = vpop.f32.mrf.mxu0
    %v193 = vadd.f32 0.0, %v192
    %194 = vmatmul.f32.gmra.mxu0 %v32
    %v195 = vpop.f32.mrf.mxu0
    %v196 = vadd.f32 0.0, %v195
    %197 = vmatmul.f32.gmra.mxu0 %v33
    %v198 = vpop.f32.mrf.mxu0
    %v199 = vadd.f32 0.0, %v198
    %200 = vmatmul.f32.gmra.mxu0 %v34
    %v201 = vpop.f32.mrf.mxu0
    %v202 = vadd.f32 0.0, %v201
    %203 = vmatmul.f32.gmra.mxu0 %v35
    %v204 = vpop.f32.mrf.mxu0
    %v205 = vadd.f32 0.0, %v204
    %206 = vmatmul.f32.gmra.mxu0 %v36
    %v207 = vpop.f32.mrf.mxu0
    %v208 = vadd.f32 0.0, %v207
    %209 = vmatmul.f32.gmra.mxu0 %v37
    %v210 = vpop.f32.mrf.mxu0
    %v211 = vadd.f32 0.0, %v210
    %212 = vmatmul.f32.gmra.mxu0 %v38
    %v213 = vpop.f32.mrf.mxu0
    %v214 = vadd.f32 0.0, %v213
    %215 = vmatmul.f32.gmra.mxu0 %v39
    %v216 = vpop.f32.mrf.mxu0
    %v217 = vadd.f32 0.0, %v216
    %218 = vmatmul.f32.gmra.mxu0 %v40
    %v219 = vpop.f32.mrf.mxu0
    %v220 = vadd.f32 0.0, %v219
    %221 = vmatmul.f32.gmra.mxu0 %v41
    %v222 = vpop.f32.mrf.mxu0
    %v223 = vadd.f32 0.0, %v222
    %224 = vmatmul.f32.gmra.mxu0 %v42
    %v225 = vpop.f32.mrf.mxu0
    %v226 = vadd.f32 0.0, %v225
    %227 = vmatmul.f32.gmra.mxu0 %v43
    %v228 = vpop.f32.mrf.mxu0
    %v229 = vadd.f32 0.0, %v228
    %230 = vmatmul.f32.gmra.mxu0 %v44
    %v231 = vpop.f32.mrf.mxu0
    %v232 = vadd.f32 0.0, %v231
    %233 = vmatmul.f32.gmra.mxu0 %v45
    %v234 = vpop.f32.mrf.mxu0
    %v235 = vadd.f32 0.0, %v234
    %236 = vmatmul.f32.gmra.mxu0 %v46
    %v237 = vpop.f32.mrf.mxu0
    %v238 = vadd.f32 0.0, %v237
    %239 = vdwg.mxu0
    %v240 = vmul.f32 %v193, %v82
    %v241 = vmul.f32 %v196, %v87
    %v242 = vmul.f32 %v199, %v92
    %v243 = vmul.f32 %v202, %v97
    %v244 = vmul.f32 %v205, %v102
    %v245 = vmul.f32 %v208, %v107
    %v246 = vmul.f32 %v211, %v112
    %v247 = vmul.f32 %v214, %v117
    %v248 = vmul.f32 %v217, %v122
    %v249 = vmul.f32 %v220, %v127
    %v250 = vmul.f32 %v223, %v132
    %v251 = vmul.f32 %v226, %v137
    %v252 = vmul.f32 %v229, %v142
    %v253 = vmul.f32 %v232, %v147
    %v254 = vmul.f32 %v235, %v152
    %v255 = vmul.f32 %v238, %v157
    %v256 = vmul.f32 %v240, %v82
    %v257 = vmul.f32 %v241, %v87
    %v258 = vmul.f32 %v242, %v92
    %v259 = vmul.f32 %v243, %v97
    %v260 = vmul.f32 %v244, %v102
    %v261 = vmul.f32 %v245, %v107
    %v262 = vmul.f32 %v246, %v112
    %v263 = vmul.f32 %v247, %v117
    %v264 = vmul.f32 %v248, %v122
    %v265 = vmul.f32 %v249, %v127
    %v266 = vmul.f32 %v250, %v132
    %v267 = vmul.f32 %v251, %v137
    %v268 = vmul.f32 %v252, %v142
    %v269 = vmul.f32 %v253, %v147
    %v270 = vmul.f32 %v254, %v152
    %v271 = vmul.f32 %v255, %v157
    %272 = vmatpush.msra.mxu0 %v271
    %273 = vmatpush.msra.mxu0 %v270
    %274 = vmatpush.msra.mxu0 %v269
    %275 = vmatpush.msra.mxu0 %v268
    %276 = vmatpush.msra.mxu0 %v267
    %277 = vmatpush.msra.mxu0 %v266
    %278 = vmatpush.msra.mxu0 %v265
    %279 = vmatpush.msra.mxu0 %v264
    %280 = vmatpush.msra.mxu0 %v263
    %281 = vmatpush.msra.mxu0 %v262
    %282 = vmatpush.msra.mxu0 %v261
    %283 = vmatpush.msra.mxu0 %v260
    %284 = vmatpush.msra.mxu0 %v259
    %285 = vmatpush.msra.mxu0 %v258
    %286 = vmatpush.msra.mxu0 %v257
    %287 = vmatpush.msra.mxu0 %v256
    %288 = vmatmul.f32.gmra.mxu0 %v31
    %v289 = vpop.f32.mrf.mxu0
    %v290 = vadd.f32 0.0, %v289
    %291 = vmatmul.f32.gmra.mxu0 %v32
    %v292 = vpop.f32.mrf.mxu0
    %v293 = vadd.f32 0.0, %v292
    %294 = vmatmul.f32.gmra.mxu0 %v33
    %v295 = vpop.f32.mrf.mxu0
    %v296 = vadd.f32 0.0, %v295
    %297 = vmatmul.f32.gmra.mxu0 %v34
    %v298 = vpop.f32.mrf.mxu0
    %v299 = vadd.f32 0.0, %v298
    %300 = vmatmul.f32.gmra.mxu0 %v35
    %v301 = vpop.f32.mrf.mxu0
    %v302 = vadd.f32 0.0, %v301
    %303 = vmatmul.f32.gmra.mxu0 %v36
    %v304 = vpop.f32.mrf.mxu0
    %v305 = vadd.f32 0.0, %v304
    %306 = vmatmul.f32.gmra.mxu0 %v37
    %v307 = vpop.f32.mrf.mxu0
    %v308 = vadd.f32 0.0, %v307
    %309 = vmatmul.f32.gmra.mxu0 %v38
    %v310 = vpop.f32.mrf.mxu0
    %v311 = vadd.f32 0.0, %v310
    %312 = vmatmul.f32.gmra.mxu0 %v39
    %v313 = vpop.f32.mrf.mxu0
    %v314 = vadd.f32 0.0, %v313
    %315 = vmatmul.f32.gmra.mxu0 %v40
    %v316 = vpop.f32.mrf.mxu0
    %v317 = vadd.f32 0.0, %v316
    %318 = vmatmul.f32.gmra.mxu0 %v41
    %v319 = vpop.f32.mrf.mxu0
    %v320 = vadd.f32 0.0, %v319
    %321 = vmatmul.f32.gmra.mxu0 %v42
    %v322 = vpop.f32.mrf.mxu0
    %v323 = vadd.f32 0.0, %v322
    %324 = vmatmul.f32.gmra.mxu0 %v43
    %v325 = vpop.f32.mrf.mxu0
    %v326 = vadd.f32 0.0, %v325
    %327 = vmatmul.f32.gmra.mxu0 %v44
    %v328 = vpop.f32.mrf.mxu0
    %v329 = vadd.f32 0.0, %v328
    %330 = vmatmul.f32.gmra.mxu0 %v45
    %v331 = vpop.f32.mrf.mxu0
    %v332 = vadd.f32 0.0, %v331
    %333 = vmatmul.f32.gmra.mxu0 %v46
    %v334 = vpop.f32.mrf.mxu0
    %v335 = vadd.f32 0.0, %v334
    %336 = vdwg.mxu0
    %v337 = vmul.f32 %v290, %v82
    %v338 = vmul.f32 %v293, %v87
    %v339 = vmul.f32 %v296, %v92
    %v340 = vmul.f32 %v299, %v97
    %v341 = vmul.f32 %v302, %v102
    %v342 = vmul.f32 %v305, %v107
    %v343 = vmul.f32 %v308, %v112
    %v344 = vmul.f32 %v311, %v117
    %v345 = vmul.f32 %v314, %v122
    %v346 = vmul.f32 %v317, %v127
    %v347 = vmul.f32 %v320, %v132
    %v348 = vmul.f32 %v323, %v137
    %v349 = vmul.f32 %v326, %v142
    %v350 = vmul.f32 %v329, %v147
    %v351 = vmul.f32 %v332, %v152
    %v352 = vmul.f32 %v335, %v157
    %353 = vst [vmem:[#allocation5] sm:$0xff] %v337
    %354 = vst [vmem:[#allocation5 + $0x8] sm:$0xff] %v338
    %355 = vst [vmem:[#allocation5 + $0x10] sm:$0xff] %v339
    %356 = vst [vmem:[#allocation5 + $0x18] sm:$0xff] %v340
    %357 = vst [vmem:[#allocation5 + $0x20] sm:$0xff] %v341
    %358 = vst [vmem:[#allocation5 + $0x28] sm:$0xff] %v342
    %359 = vst [vmem:[#allocation5 + $0x30] sm:$0xff] %v343
    %360 = vst [vmem:[#allocation5 + $0x38] sm:$0xff] %v344
    %361 = vst [vmem:[#allocation5 + $0x40] sm:$0xff] %v345
    %362 = vst [vmem:[#allocation5 + $0x48] sm:$0xff] %v346
    %363 = vst [vmem:[#allocation5 + $0x50] sm:$0xff] %v347
    %364 = vst [vmem:[#allocation5 + $0x58] sm:$0xff] %v348
    %365 = vst [vmem:[#allocation5 + $0x60] sm:$0xff] %v349
    %366 = vst [vmem:[#allocation5 + $0x68] sm:$0xff] %v350
    %367 = vst [vmem:[#allocation5 + $0x70] sm:$0xff] %v351
    %368 = vst [vmem:[#allocation5 + $0x78] sm:$0xff] %v352
    // Predicated region
    $region18: #{tpu_custom_call.1} parent=1 // pred_check
      _
    $region19: #{tpu_custom_call.1} parent=1 // pred_check_branch
      %370 = sbr.rel (0) target = $region21
    $region20: #{tpu_custom_call.1} parent=1 // pred_region
      %372 = vsyncadd [#allocation4], 0
      %s373 = sshll.u32 [#allocation5], 4
      %s374 = int_to_ptr.vmem [resolvable:$true] %s373
      %s375 = sshll.u32 %s3, 4
      %s376 = int_to_ptr.hbm [resolvable:$true] %s375
      %381 = dma.vmem_to_hbm [thread:$0]  %s374, 2048, %s376, [#allocation4], 128, 128, 8
    $region21: #{tpu_custom_call.1} parent=1 // pred_fallthru
      _
    // Predicated region
    $region22: #{tpu_custom_call.1} parent=1 // pred_check
      _
    $region23: #{tpu_custom_call.1} parent=1 // pred_check_branch
      %383 = sbr.rel (0) target = $region25
    $region24: #{tpu_custom_call.1} parent=1 // pred_region
      %385 = dma.done [#allocation4], 2048
    $region25: #{tpu_custom_call.1} parent=1 // pred_fallthru
      _
    %386 = vsyncpa [#allocation3], 1
    %387 = vsyncpa [#allocation4], 1

</llo_original>
